<compile_context>
chip_gen: v7x
topology: tpu7x:2x2x1
jax: 0.10.0
libtpu: 0.0.40
codegen_flags: <defaults>
</compile_context>

<pallas_src>
import jax
import jax.numpy as jnp
from jax.experimental import pallas as pl
from jax.experimental.pallas import tpu as pltpu


def _affine_vpu_kernel(x_ref, wt_ref, b_ref, o_ref):
    # x_ref:  (TB, IN)    activation tile
    # wt_ref: (IN, OUT)   weight, already transposed in the wrapper
    # b_ref:  (1,  OUT)   bias
    # o_ref:  (TB, OUT)
    x = x_ref[...]
    wt = wt_ref[...]
    b = b_ref[...]

    tb = x.shape[0]
    in_dim = x.shape[1]
    out_dim = wt.shape[1]

    # K is tiny (2): unrolled VPU mul/add chain instead of an MXU pass.
    acc = jnp.broadcast_to(b, (tb, out_dim)).astype(jnp.float32)
    for k in range(in_dim):
        acc = acc + x[:, k : k + 1].astype(jnp.float32) * wt[k : k + 1, :].astype(
            jnp.float32
        )
    o_ref[...] = acc.astype(o_ref.dtype)


def _round_up(n, m):
    return ((n + m - 1) // m) * m


def addmm_stack(x, weight, bias, *, stack_n=3, block_b=None):
    """t1 = x @ weight.T + bias, then stack([t1]*stack_n, axis=1)."""
    B, IN = x.shape
    OUT = weight.shape[0]

    # Pre-transpose the (OUT, IN) weight once in the wrapper (free at trace
    # time for a tiny constant) so the kernel never touches a transposed RHS.
    w_t = jnp.transpose(weight)          # (IN, OUT)
    bias2d = bias.reshape(1, OUT)        # (1, OUT)

    # Batch tiling: single block for tiny B; for large B aim for >=4 grid
    # blocks (megacore on v7x + pipelining) while keeping the second-to-last
    # block dim a multiple of 8.
    if block_b is None:
        if B <= 16:
            block_b = B
        else:
            block_b = min(512, max(8, _round_up(pl.cdiv(B, 4), 8)))

    t1 = pl.pallas_call(
        _affine_vpu_kernel,
        out_shape=jax.ShapeDtypeStruct((B, OUT), x.dtype),
        grid=(pl.cdiv(B, block_b),),
        in_specs=[
            pl.BlockSpec((block_b, IN), lambda i: (i, 0)),
            pl.BlockSpec((IN, OUT), lambda i: (0, 0)),
            pl.BlockSpec((1, OUT), lambda i: (0, 0)),
        ],
        out_specs=pl.BlockSpec((block_b, OUT), lambda i: (i, 0)),
        compiler_params=pltpu.CompilerParams(
            dimension_semantics=("parallel",),
        ),
    )(x, w_t, bias2d)

    # torch.stack([t1] * stack_n, dim=1) as a metadata-level XLA broadcast.
    return jnp.broadcast_to(t1[:, None, :], (B, stack_n, OUT))


if __name__ == "__main__":
    key = jax.random.PRNGKey(0)
    kx, kw, kb = jax.random.split(key, 3)

    B, IN, OUT = 2, 2, 3
    # Deterministic parameter init (Linear(2, 3)): weight (3, 2), bias (3,)
    bound = 1.0 / (IN ** 0.5)
    weight = jax.random.uniform(kw, (OUT, IN), jnp.float32, -bound, bound)
    bias = jax.random.uniform(kb, (OUT,), jnp.float32, -bound, bound)

    x = jax.random.normal(kx, (B, IN), jnp.float32)

    out = addmm_stack(x, weight, bias)
    out = jax.block_until_ready(out)

    # Reference check in plain JAX.
    t1_ref = x @ weight.T + bias
    ref = jnp.broadcast_to(t1_ref[:, None, :], (B, 3, OUT))
    assert out.shape == (B, 3, OUT), out.shape
    assert jnp.allclose(out, ref, atol=1e-5), "mismatch vs reference"

    print("KERNEL_OK")
</pallas_src>

<mosaic_0001>
module attributes {stable_mosaic.version = 11 : i64} {
  func.func @_affine_vpu_kernel(%arg0: i32, %arg1: memref<2x2xf32, #tpu.memory_space<vmem>>, %arg2: memref<2x3xf32, #tpu.memory_space<vmem>>, %arg3: memref<1x3xf32, #tpu.memory_space<vmem>>, %arg4: memref<2x3xf32, #tpu.memory_space<vmem>>) attributes {dimension_semantics = [#tpu.dimension_semantics<parallel>], iteration_bounds = array<i64: 1>, scalar_prefetch = 0 : i64, scratch_operands = 0 : i64, tpu.core_type = #tpu.core_type<tc>, window_params = [{transform_indices = @transform_0, window_bounds = array<i64: 2, 2>}, {pipeline_mode = #tpu.pipeline_mode<synchronous>, transform_indices = @transform_1, window_bounds = array<i64: 2, 3>}, {pipeline_mode = #tpu.pipeline_mode<synchronous>, transform_indices = @transform_2, window_bounds = array<i64: 1, 3>}, {transform_indices = @transform_3, window_bounds = array<i64: 2, 3>}]} {
    %c0 = arith.constant 0 : index
    %c0_0 = arith.constant 0 : index
    %0 = vector.load %arg1[%c0, %c0_0] : memref<2x2xf32, #tpu.memory_space<vmem>>, vector<2x2xf32>
    %c0_1 = arith.constant 0 : index
    %c0_2 = arith.constant 0 : index
    %1 = vector.load %arg2[%c0_1, %c0_2] : memref<2x3xf32, #tpu.memory_space<vmem>>, vector<2x3xf32>
    %c0_3 = arith.constant 0 : index
    %c0_4 = arith.constant 0 : index
    %2 = vector.load %arg3[%c0_3, %c0_4] : memref<1x3xf32, #tpu.memory_space<vmem>>, vector<1x3xf32>
    %3 = vector.shape_cast %2 : vector<1x3xf32> to vector<1x3xf32>
    %4 = vector.broadcast %3 : vector<1x3xf32> to vector<2x3xf32>
    %5 = vector.extract_strided_slice %0 {offsets = [0, 0], sizes = [2, 1], strides = [1, 1]} : vector<2x2xf32> to vector<2x1xf32>
    %6 = vector.extract_strided_slice %1 {offsets = [0, 0], sizes = [1, 3], strides = [1, 1]} : vector<2x3xf32> to vector<1x3xf32>
    %7 = vector.broadcast %5 : vector<2x1xf32> to vector<2x3xf32>
    %8 = vector.broadcast %6 : vector<1x3xf32> to vector<2x3xf32>
    %9 = arith.mulf %7, %8 : vector<2x3xf32>
    %10 = arith.addf %4, %9 : vector<2x3xf32>
    %11 = vector.extract_strided_slice %0 {offsets = [0, 1], sizes = [2, 1], strides = [1, 1]} : vector<2x2xf32> to vector<2x1xf32>
    %12 = vector.extract_strided_slice %1 {offsets = [1, 0], sizes = [1, 3], strides = [1, 1]} : vector<2x3xf32> to vector<1x3xf32>
    %13 = vector.broadcast %11 : vector<2x1xf32> to vector<2x3xf32>
    %14 = vector.broadcast %12 : vector<1x3xf32> to vector<2x3xf32>
    %15 = arith.mulf %13, %14 : vector<2x3xf32>
    %16 = arith.addf %10, %15 : vector<2x3xf32>
    %c0_5 = arith.constant 0 : index
    %c0_6 = arith.constant 0 : index
    %17 = vector.load %arg4[%c0_5, %c0_6] : memref<2x3xf32, #tpu.memory_space<vmem>>, vector<2x3xf32>
    tpu.vector_store %arg4[%c0_5, %c0_6], %16 {strides = array<i32>} : memref<2x3xf32, #tpu.memory_space<vmem>>, vector<2x3xf32>,
    return
  }
  func.func @transform_0(%arg0: i32) -> (i32, i32) {
    %c0_i32 = arith.constant 0 : i32
    %c0_i32_0 = arith.constant 0 : i32
    return %arg0, %c0_i32 : i32, i32
  }
  func.func @transform_1(%arg0: i32) -> (i32, i32) {
    %c0_i32 = arith.constant 0 : i32
    %c0_i32_0 = arith.constant 0 : i32
    %c0_i32_1 = arith.constant 0 : i32
    return %c0_i32, %c0_i32_0 : i32, i32
  }
  func.func @transform_2(%arg0: i32) -> (i32, i32) {
    %c0_i32 = arith.constant 0 : i32
    %c0_i32_0 = arith.constant 0 : i32
    %c0_i32_1 = arith.constant 0 : i32
    return %c0_i32, %c0_i32_0 : i32, i32
  }
  func.func @transform_3(%arg0: i32) -> (i32, i32) {
    %c0_i32 = arith.constant 0 : i32
    %c0_i32_0 = arith.constant 0 : i32
    return %arg0, %c0_i32 : i32, i32
  }
}

</mosaic_0001>

<llo_original>
// kernel: tpu_custom_call.1
$region0: #{tpu_custom_call.1}
  #allocation0 [shape = 'u32[]', space=smem, size = 0x4, offset = 0x4, fixed_abs, tag = 'smem constant byte address 0x4 - core index']
  #allocation1 [shape = 'u32[144,128]{1,0:T(1,128)}', space=vmem, size = 0x12000, scoped, tag = 'internal scratch']
  %s0 = inlined_call_operand.hbm [shape: f32[2,2], index: 0, kind: input, shape index: {}]
  %s1 = inlined_call_operand.vmem [shape: f32[2,3], index: 1, kind: input, shape index: {}]
  %s2 = inlined_call_operand.vmem [shape: f32[1,3], index: 2, kind: input, shape index: {}]
  %s3 = inlined_call_operand.hbm [shape: f32[2,3], index: 3, kind: output, shape index: {}]
  %s4 = sld [smem:[#allocation0]]
  $region26: #{tpu_custom_call.1} parent=0
    _
  %s6 = ssub.s32 1, %s4
  %s7 = scalar_select 0, %s6, %s4
  $region1: #{tpu_custom_call.1} parent=0
    #allocation2 [shape = 'u8[1024]{0}', space=vmem, size = 0x400, scoped, tag = 'input window, operand 0, single buffered']
    #allocation3 [shape = 's32[1]{0}', space=sflag, size = 0x4, scoped, tag = 'scoped memory for tpu_custom_call.1']
    #allocation4 [shape = 's32[1]{0}', space=sflag, size = 0x4, scoped, tag = 'scoped memory for tpu_custom_call.1']
    #allocation5 [shape = 'u8[1024]{0}', space=vmem, size = 0x400, scoped, tag = 'output window, operand 0, single buffered']
    %8 = vsyncpa [#allocation3], 0
    %9 = vsyncpa [#allocation4], 0
    // Predicated region
    $region2: #{tpu_custom_call.1} parent=1 // pred_check
      _
    $region3: #{tpu_custom_call.1} parent=1 // pred_check_branch
      %11 = sbr.rel (0) target = $region5
    $region4: #{tpu_custom_call.1} parent=1 // pred_region
      %s13 = ssub.s32 32, 32
      %14 = vsyncadd [#allocation3], %s13
      %s16 = sshll.u32 [#allocation2], 4
      %s17 = int_to_ptr.vmem [resolvable:$true] %s16
      %19 = dma.hbm_to_vmem [thread:$0]  %s0, 32, %s17, [#allocation3]
    $region5: #{tpu_custom_call.1} parent=1 // pred_fallthru
      _
    // Predicated region
    $region6: #{tpu_custom_call.1} parent=1 // pred_check
      _
    $region7: #{tpu_custom_call.1} parent=1 // pred_check_branch
      %21 = sbr.rel (0) target = $region9
    $region8: #{tpu_custom_call.1} parent=1 // pred_region
      _
    $region9: #{tpu_custom_call.1} parent=1 // pred_fallthru
      _
    // Predicated region
    $region10: #{tpu_custom_call.1} parent=1 // pred_check
      _
    $region11: #{tpu_custom_call.1} parent=1 // pred_check_branch
      %23 = sbr.rel (0) target = $region13
    $region12: #{tpu_custom_call.1} parent=1 // pred_region
      _
    $region13: #{tpu_custom_call.1} parent=1 // pred_fallthru
      _
    // Predicated region
    $region14: #{tpu_custom_call.1} parent=1 // pred_check
      _
    $region15: #{tpu_custom_call.1} parent=1 // pred_check_branch
      %25 = sbr.rel (0) target = $region17
    $region16: #{tpu_custom_call.1} parent=1 // pred_region
      %26 = dma.done [#allocation3], 32
    $region17: #{tpu_custom_call.1} parent=1 // pred_fallthru
      _
    %v27 = vld [vmem:[#allocation2] sm:$0x3]
    %v28 = vld [vmem:[%s1] sm:$0x3]
    %v29 = vld [vmem:[%s2] sm:$0x1]
    %v31 = vlaneseq
    %v32 = vshrl.u32 %v31, 7
    %v33 = vsub.s32 0, %v32
    %v34 = vrot.slane %v29, %v33
    %37 = vset.pattern.permute.xlu0 0
    %38 = vperm.xlu0 %37, %v27
    %v39 = vpop.permute.xlu0 %38
    %v41 = vlaneseq
    %v42 = vshrl.u32 %v41, 7
    %v43 = vsub.s32 0, %v42
    %v44 = vrot.slane %v28, %v43
    %v45 = vmul.f32 %v39, %v44
    %v46 = vadd.f32 %v34, %v45
    %47 = vset.pattern.permute.xlu0 1
    %48 = vperm.xlu0 %47, %v27
    %v49 = vpop.permute.xlu0 %48
    %v51 = vlaneseq
    %v52 = vshrl.u32 %v51, 7
    %v53 = vsub.s32 1, %v52
    %v54 = vrot.slane %v28, %v53
    %v55 = vmul.f32 %v49, %v54
    %v56 = vadd.f32 %v46, %v55
    %vm57 = vcmask 17408
    %58 = vst.msk [vmem:[#allocation5] sm:$0x3] %vm57, %v56
    // Predicated region
    $region18: #{tpu_custom_call.1} parent=1 // pred_check
      _
    $region19: #{tpu_custom_call.1} parent=1 // pred_check_branch
      %60 = sbr.rel (0) target = $region21
    $region20: #{tpu_custom_call.1} parent=1 // pred_region
      %s62 = ssub.s32 32, 32
      %63 = vsyncadd [#allocation4], %s62
      %s65 = sshll.u32 [#allocation5], 4
      %s66 = int_to_ptr.vmem [resolvable:$true] %s65
      %68 = dma.vmem_to_hbm [thread:$0]  %s66, 32, %s3, [#allocation4]
    $region21: #{tpu_custom_call.1} parent=1 // pred_fallthru
      _
    // Predicated region
    $region22: #{tpu_custom_call.1} parent=1 // pred_check
      _
    $region23: #{tpu_custom_call.1} parent=1 // pred_check_branch
      %70 = sbr.rel (0) target = $region25
    $region24: #{tpu_custom_call.1} parent=1 // pred_region
      %71 = dma.done [#allocation4], 32
    $region25: #{tpu_custom_call.1} parent=1 // pred_fallthru
      _
    %72 = vsyncpa [#allocation3], 1
    %73 = vsyncpa [#allocation4], 1

</llo_original>
